<compile_context>
chip_gen: v5e
topology: v5e:2x2
jax: 0.10.0
libtpu: 0.0.40
codegen_flags: <defaults>
</compile_context>

<pallas_src>
import functools

import jax
import jax.numpy as jnp
from jax.experimental import pallas as pl
from jax.experimental.pallas import tpu as pltpu


def _round_up(x, m):
    return ((x + m - 1) // m) * m


def _round_down(x, m):
    return (x // m) * m


def _preferred_compute_dtype():
    # v5e has no native f32 MXU path (f32 operands -> multiple bf16 passes), which
    # makes this kernel compute-bound there; prefer bf16 operands. v6e/v7x hide the
    # f32 matmul under the x DMA, so keep f32 for exactness by default.
    try:
        kind = jax.devices()[0].device_kind.lower()
    except Exception:
        return jnp.float32
    if "v5 lite" in kind or "v5lite" in kind or "v5e" in kind:
        return jnp.bfloat16
    return jnp.float32


def _rot_anchor_kernel(x_ref, w_ref, b_ref, anchor_ref, o_ref, acc_ref, *,
                       a_pad, deg_value_scale, compute_dtype, f_total, tk):
    """Fused regressor + anchor decode with a K-tiled accumulator.

    x_ref      : (TB, TK)       flattened activation tile (batch i, K block k)
    w_ref      : (TK, 2*AP)     packed weight  [part | value], lane/K padded
    b_ref      : (1, 2*AP)      packed bias    [part | value], part pad = -1e30 (f32)
    anchor_ref : (1, AP)        degree anchors, zero padded (f32)
    o_ref      : (1, TB)        lane-dense decoded degrees for this batch tile
    acc_ref    : (TB, 2*AP) f32 VMEM accumulator, persists across the K axis
    """
    k = pl.program_id(1)
    nk = pl.num_programs(1)

    @pl.when(k == 0)
    def _init():
        acc_ref[...] = jnp.zeros_like(acc_ref)

    x = x_ref[...]
    if f_total % tk != 0:
        # Tail K block extends past x's real columns (stale VMEM). Zero them so
        # they cannot pollute the accumulation (the matching weight K rows are
        # zero-padded once at init, so no garbage reaches the MXU from either side).
        col = jax.lax.broadcasted_iota(jnp.int32, x.shape, 1)
        x = jnp.where(col < (f_total - k * tk), x, 0)
    if x.dtype != jnp.dtype(compute_dtype):
        x = x.astype(compute_dtype)

    # Single MXU pass over this (TB, TK) tile for both logical halves; f32 accum.
    acc_ref[...] += jnp.dot(x, w_ref[...], preferred_element_type=jnp.float32)

    @pl.when(k == nk - 1)
    def _epilogue():
        y = acc_ref[...] + b_ref[...]          # f32; -1e30 sentinel in padded part cols
        part = y[:, :a_pad]                    # (TB, AP) classification logits
        vals = y[:, a_pad:]                    # (TB, AP) regression values

        # First-occurrence argmax over the part logits (torch.argmax semantics).
        col = jax.lax.broadcasted_iota(jnp.int32, part.shape, 1)      # (TB, AP)
        row_max = jnp.max(part, axis=1, keepdims=True)                # (TB, 1)
        idx = jnp.min(jnp.where(part == row_max, col, a_pad),
                      axis=1, keepdims=True)                          # (TB, 1)

        # Data-dependent gather as a one-hot reduction; anchor add and the
        # deg_value_scale multiply fold into a single FMA + one lane reduction.
        onehot = (col == idx).astype(jnp.float32)                     # (TB, AP)
        decoded = anchor_ref[...] + vals * deg_value_scale            # (TB, AP)
        deg = jnp.sum(onehot * decoded, axis=1)                       # (TB,)
        o_ref[...] = deg[None, :]                                     # lane-dense (1, TB)


class RotAnchorPallas:
    """JAX/Pallas port of yoro RotAnchor (forward path only)."""

    _TILE_VMEM_BUDGET = 24 * 1024 * 1024   # kernel operand budget (fits v7x 64 MiB phys)
    _WEIGHT_TILE_BUDGET = 8 * 1024 * 1024  # double-buffered weight K-tile cap
    _VMEM_LIMIT_BYTES = 48 * 1024 * 1024   # scoped limit: < v7x physical, > v5e default
    _MAX_TB = 512

    def __init__(self, in_features, width, height, deg_min, deg_max, deg_part_size,
                 key=jax.random.PRNGKey(0), compute_dtype=None,
                 single_buffer_params=False):
        self.width = width
        self.height = height
        self.degMin = deg_min
        self.degMax = deg_max
        self.degPartSize = deg_part_size
        self.degValueScale = float(deg_part_size) / 2.0
        self.compute_dtype = (_preferred_compute_dtype()
                              if compute_dtype is None else compute_dtype)
        self.in_features = in_features
        self.single_buffer_params = single_buffer_params

        # torch.arange(deg_min, deg_max + deg_part_size, deg_part_size)
        self.degAnchor = jnp.arange(deg_min, deg_max + deg_part_size, deg_part_size,
                                    dtype=jnp.float32)
        A = int(self.degAnchor.shape[0])
        self.degPartDepth = A
        self.degValueDepth = A
        out_features = 2 * A

        # Deterministic Linear init, same family as torch default:
        # U(-1/sqrt(fan_in), 1/sqrt(fan_in)).
        kw, kb = jax.random.split(key)
        bound = 1.0 / (in_features ** 0.5)
        self.weight = jax.random.uniform(kw, (in_features, out_features),
                                         jnp.float32, -bound, bound)
        self.bias = jax.random.uniform(kb, (out_features,), jnp.float32, -bound, bound)

        # --- anchor/lane padding + K tiling decided ONCE ----------------------
        AP = _round_up(A, 128)                 # anchors padded to a 128-lane group
        self.a_pad = AP
        w_itemsize = jnp.dtype(self.compute_dtype).itemsize

        # K tile: largest 128-multiple keeping the double-buffered weight tile and
        # a 256-row f32 x tile within their budgets; full F if it already fits.
        max_tk_w = self._WEIGHT_TILE_BUDGET // (2 * 2 * AP * w_itemsize)
        max_tk_x = (8 * 1024 * 1024) // (2 * 256 * 4)
        tk_cap = max(128, _round_down(min(max_tk_w, max_tk_x), 128))
        self.tk = in_features if in_features <= tk_cap else tk_cap
        self.nk = -(-in_features // self.tk)
        f_pad = self.nk * self.tk              # weight K dim padded so every w block
        self.f_pad = f_pad                     # is fully in-bounds (zero rows).

        # --- pack / pad parameters ONCE (no per-call slicing/casts) -----------
        w_packed = jnp.zeros((f_pad, 2 * AP), jnp.float32)
        w_packed = w_packed.at[:in_features, :A].set(self.weight[:, :A])         # part
        w_packed = w_packed.at[:in_features, AP:AP + A].set(self.weight[:, A:])  # value
        self.w_packed = w_packed.astype(self.compute_dtype)

        b_packed = jnp.zeros((1, 2 * AP), jnp.float32)
        b_packed = b_packed.at[0, :A].set(self.bias[:A])
        # Padded part columns must NEVER win the argmax. Keep this array in f32.
        b_packed = b_packed.at[0, A:AP].set(-1e30)
        b_packed = b_packed.at[0, AP:AP + A].set(self.bias[A:])
        self.b_packed = b_packed

        anchor_packed = jnp.zeros((1, AP), jnp.float32)
        self.anchor_packed = anchor_packed.at[0, :A].set(self.degAnchor)

    # ------------------------------------------------------------------ tiling
    def _choose_tb(self, batch, x_itemsize):
        ap = self.a_pad
        w_itemsize = jnp.dtype(self.compute_dtype).itemsize
        # Grid-invariant / K-tiled cost: double-buffered weight tile + bias/anchor.
        fixed = 2 * self.tk * 2 * ap * w_itemsize + 2 * 3 * ap * 4
        # Per batch-row VMEM: double-buffered x slab, f32 accumulator, epilogue
        # temporaries (part/vals/col/onehot/decoded slack), output row.
        per_row = 2 * self.tk * x_itemsize + 2 * ap * 4 + 6 * ap * 4 + 2 * 4
        tb = max(8, (self._TILE_VMEM_BUDGET - fixed) // per_row)
        tb = max(1, min(tb, self._MAX_TB, batch))
        if tb < batch:
            tb = max(16, _round_down(tb, 16))      # sublane-aligned tiles (f32/bf16)
        elif batch >= 64:
            # Ensure >= 2 batch tiles so the "parallel" axis can shard across both
            # TensorCores on v7x (one extra ~0.35 us step on single-TC v5e/v6e).
            tb = _round_up(-(-batch // 2), 16)
        return tb

    # ------------------------------------------------------------------ forward
    def __call__(self, x_nchw):
        B = x_nchw.shape[0]
        F = self.in_features
        AP = self.a_pad
        TK = self.tk
        nk = self.nk

        # Glue: NCHW flatten (matches torch.nn.Flatten on contiguous NCHW).
        # No wrapper-side dtype cast (that would be an extra full HBM pass); the
        # cast to compute_dtype — if needed — happens in-kernel. If the producer
        # can emit bf16 activations, pass them directly: it halves the x DMA.
        x = x_nchw.reshape(B, F)

        TB = self._choose_tb(B, jnp.dtype(x.dtype).itemsize)
        nb = -(-B // TB)

        kernel = functools.partial(_rot_anchor_kernel,
                                   a_pad=AP,
                                   deg_value_scale=self.degValueScale,
                                   compute_dtype=self.compute_dtype,
                                   f_total=F,
                                   tk=TK)

        # Optional (v7x VMEM headroom): single-buffer the grid-invariant operands.
        const_kw = ({"pipeline_mode": pl.Buffered(1)}
                    if self.single_buffer_params else {})
        w_kw = const_kw if nk == 1 else {}

        out = pl.pallas_call(
            kernel,
            out_shape=jax.ShapeDtypeStruct((nb, TB), jnp.float32),
            grid_spec=pltpu.PrefetchScalarGridSpec(
                num_scalar_prefetch=0,
                grid=(nb, nk),                                      # reduction axis last
                in_specs=[
                    pl.BlockSpec((TB, TK), lambda i, k: (i, k)),            # x tile
                    pl.BlockSpec((TK, 2 * AP), lambda i, k: (k, 0), **w_kw),  # weight
                    pl.BlockSpec((1, 2 * AP), lambda i, k: (0, 0), **const_kw),  # bias
                    pl.BlockSpec((1, AP), lambda i, k: (0, 0), **const_kw),      # anchors
                ],
                out_specs=pl.BlockSpec((1, TB), lambda i, k: (i, 0)),  # lane-dense row
                scratch_shapes=[pltpu.VMEM((TB, 2 * AP), jnp.float32)],
            ),
            compiler_params=pltpu.CompilerParams(
                dimension_semantics=("parallel", "arbitrary"),
                vmem_limit_bytes=self._VMEM_LIMIT_BYTES),
        )(x, self.w_packed, self.b_packed, self.anchor_packed)

        # (nb, TB) lane-dense slab -> (B,); padded tail rows are discarded.
        return out.reshape(-1)[:B]

    # Pure-JAX reference of the PyTorch forward, for verification.
    def reference(self, x_nchw, compute_dtype=None):
        B = x_nchw.shape[0]
        x = x_nchw.reshape(B, self.in_features)
        w = self.weight
        if compute_dtype is not None:
            x = x.astype(compute_dtype)
            w = w.astype(compute_dtype)
        logits = jnp.dot(x, w, preferred_element_type=jnp.float32) + self.bias
        A = self.degPartDepth
        idx = jnp.argmax(logits[:, :A], axis=1)
        shift = jnp.take_along_axis(logits[:, A:], idx[:, None], axis=1)[:, 0]
        return self.degAnchor[idx] + shift * self.degValueScale


if __name__ == "__main__":
    # Small, module-consistent shapes: batch=2, channels=4, spatial=16x16
    # -> in_features = 4*16*16 = 1024; anchors for [-180, 180] step 45 -> 9.
    B, C, H, W = 2, 4, 16, 16
    key = jax.random.PRNGKey(0)
    k_x, k_x2, k_p = jax.random.split(key, 3)
    x = jax.random.normal(k_x, (B, C, H, W), dtype=jnp.float32)

    # f32 operands: faithful to the PyTorch forward numerics.
    mod = RotAnchorPallas(in_features=C * H * W, width=W, height=H,
                          deg_min=-180, deg_max=180, deg_part_size=45,
                          key=k_p, compute_dtype=jnp.float32)
    out = mod(x)
    jax.block_until_ready(out)
    ref = mod.reference(x)
    assert out.shape == (B,)
    assert bool(jnp.allclose(out, ref, atol=5e-3, rtol=1e-4)), (out, ref)

    # bf16 operands (v5e MXU-rate path), f32 accumulation; compared against a
    # reference using the same operand precision so the check isolates kernel logic.
    mod_bf16 = RotAnchorPallas(in_features=C * H * W, width=W, height=H,
                               deg_min=-180, deg_max=180, deg_part_size=45,
                               key=k_p, compute_dtype=jnp.bfloat16)
    out_bf16 = mod_bf16(x)
    jax.block_until_ready(out_bf16)
    ref_bf16 = mod_bf16.reference(x, compute_dtype=jnp.bfloat16)
    assert bool(jnp.allclose(out_bf16, ref_bf16, atol=2e-1, rtol=1e-3)), (out_bf16, ref_bf16)

    # Larger batch: exercises the tiled "parallel" batch axis (nb=2), the batch
    # split for v7x megacore, and the partial tail tile + lane-dense writeback.
    B2 = 100
    x2 = jax.random.normal(k_x2, (B2, C, H, W), dtype=jnp.float32)
    out2 = mod(x2)
    jax.block_until_ready(out2)
    ref2 = mod.reference(x2)
    assert out2.shape == (B2,)
    assert bool(jnp.allclose(out2, ref2, atol=5e-3, rtol=1e-4)), (out2, ref2)

    print("KERNEL_OK")
</pallas_src>

<mosaic_0001>
module attributes {stable_mosaic.version = 11 : i64} {
  func.func @_rot_anchor_kernel(%arg0: i32, %arg1: i32, %arg2: memref<2x1024xf32, #tpu.memory_space<vmem>>, %arg3: memref<1024x256xf32, #tpu.memory_space<vmem>>, %arg4: memref<1x256xf32, #tpu.memory_space<vmem>>, %arg5: memref<1x128xf32, #tpu.memory_space<vmem>>, %arg6: memref<1x2xf32, #tpu.memory_space<vmem>>, %arg7: memref<2x256xf32, #tpu.memory_space<vmem>>) attributes {dimension_semantics = [#tpu.dimension_semantics<parallel>, #tpu.dimension_semantics<arbitrary>], iteration_bounds = array<i64: 1, 1>, scalar_prefetch = 0 : i64, scratch_operands = 1 : i64, tpu.core_type = #tpu.core_type<tc>, window_params = [{transform_indices = @transform_0, window_bounds = array<i64: 2, 1024>}, {transform_indices = @transform_1, window_bounds = array<i64: 1024, 256>}, {pipeline_mode = #tpu.pipeline_mode<synchronous>, transform_indices = @transform_2, window_bounds = array<i64: 1, 256>}, {pipeline_mode = #tpu.pipeline_mode<synchronous>, transform_indices = @transform_3, window_bounds = array<i64: 1, 128>}, {transform_indices = @transform_4, window_bounds = array<i64: 1, 2>}]} {
    %c0_i32 = arith.constant 0 : i32
    %0 = arith.cmpi eq, %arg1, %c0_i32 : i32
    %1 = arith.extui %0 : i1 to i32
    %c0_i32_0 = arith.constant 0 : i32
    %2 = arith.cmpi ne, %1, %c0_i32_0 : i32
    scf.if %2 {
      %cst_10 = arith.constant 0.000000e+00 : f32
      %12 = vector.broadcast %cst_10 : f32 to vector<2x256xf32>
      %c0_11 = arith.constant 0 : index
      %c0_12 = arith.constant 0 : index
      %13 = vector.load %arg7[%c0_11, %c0_12] : memref<2x256xf32, #tpu.memory_space<vmem>>, vector<2x256xf32>
      tpu.vector_store %arg7[%c0_11, %c0_12], %12 {strides = array<i32>} : memref<2x256xf32, #tpu.memory_space<vmem>>, vector<2x256xf32>,
    } else {
    }
    %c0 = arith.constant 0 : index
    %c0_1 = arith.constant 0 : index
    %3 = vector.load %arg2[%c0, %c0_1] : memref<2x1024xf32, #tpu.memory_space<vmem>>, vector<2x1024xf32>
    %c0_2 = arith.constant 0 : index
    %c0_3 = arith.constant 0 : index
    %4 = vector.load %arg7[%c0_2, %c0_3] : memref<2x256xf32, #tpu.memory_space<vmem>>, vector<2x256xf32>
    %c0_4 = arith.constant 0 : index
    %c0_5 = arith.constant 0 : index
    %5 = vector.load %arg3[%c0_4, %c0_5] : memref<1024x256xf32, #tpu.memory_space<vmem>>, vector<1024x256xf32>
    %cst = arith.constant dense<0.000000e+00> : vector<2x256xf32>
    %6 = tpu.matmul %3, %5, %cst {dimension_numbers = #tpu.dot_dimension_numbers<[1], [0], [0], [1], [0, 0, 1, 1], [], []>} : vector<2x1024xf32>, vector<1024x256xf32>, vector<2x256xf32> -> vector<2x256xf32>
    %7 = arith.addf %4, %6 : vector<2x256xf32>
    %c0_6 = arith.constant 0 : index
    %c0_7 = arith.constant 0 : index
    %8 = vector.load %arg7[%c0_6, %c0_7] : memref<2x256xf32, #tpu.memory_space<vmem>>, vector<2x256xf32>
    tpu.vector_store %arg7[%c0_6, %c0_7], %7 {strides = array<i32>} : memref<2x256xf32, #tpu.memory_space<vmem>>, vector<2x256xf32>,
    %c0_i32_8 = arith.constant 0 : i32
    %9 = arith.cmpi eq, %arg1, %c0_i32_8 : i32
    %10 = arith.extui %9 : i1 to i32
    %c0_i32_9 = arith.constant 0 : i32
    %11 = arith.cmpi ne, %10, %c0_i32_9 : i32
    scf.if %11 {
      %c0_10 = arith.constant 0 : index
      %c0_11 = arith.constant 0 : index
      %12 = vector.load %arg7[%c0_10, %c0_11] : memref<2x256xf32, #tpu.memory_space<vmem>>, vector<2x256xf32>
      %c0_12 = arith.constant 0 : index
      %c0_13 = arith.constant 0 : index
      %13 = vector.load %arg4[%c0_12, %c0_13] : memref<1x256xf32, #tpu.memory_space<vmem>>, vector<1x256xf32>
      %14 = vector.broadcast %13 : vector<1x256xf32> to vector<2x256xf32>
      %15 = arith.addf %12, %14 : vector<2x256xf32>
      %16 = vector.extract_strided_slice %15 {offsets = [0, 0], sizes = [2, 128], strides = [1, 1]} : vector<2x256xf32> to vector<2x128xf32>
      %17 = vector.extract_strided_slice %15 {offsets = [0, 128], sizes = [2, 128], strides = [1, 1]} : vector<2x256xf32> to vector<2x128xf32>
      %18 = tpu.iota {dimensions = array<i32: 1>} : vector<2x128xi32>
      %cst_14 = arith.constant dense<0xFF800000> : vector<2xf32>
      %19 = vector.multi_reduction <maximumf>, %16, %cst_14 [1] : vector<2x128xf32> to vector<2xf32>
      %20 = vector.shape_cast %19 : vector<2xf32> to vector<2x1xf32>
      %21 = vector.broadcast %20 : vector<2x1xf32> to vector<2x128xf32>
      %22 = arith.cmpf oeq, %16, %21 : vector<2x128xf32>
      %c128_i32 = arith.constant 128 : i32
      %23 = vector.broadcast %c128_i32 : i32 to vector<2x128xi32>
      %24 = arith.select %22, %18, %23 : vector<2x128xi1>, vector<2x128xi32>
      %cst_15 = arith.constant dense<2147483647> : vector<2xi32>
      %25 = vector.multi_reduction <minsi>, %24, %cst_15 [1] : vector<2x128xi32> to vector<2xi32>
      %26 = vector.shape_cast %25 : vector<2xi32> to vector<2x1xi32>
      %27 = vector.broadcast %26 : vector<2x1xi32> to vector<2x128xi32>
      %28 = arith.cmpi eq, %18, %27 : vector<2x128xi32>
      %29 = arith.extui %28 : vector<2x128xi1> to vector<2x128xi32>
      %30 = arith.sitofp %29 : vector<2x128xi32> to vector<2x128xf32>
      %c0_16 = arith.constant 0 : index
      %c0_17 = arith.constant 0 : index
      %31 = vector.load %arg5[%c0_16, %c0_17] : memref<1x128xf32, #tpu.memory_space<vmem>>, vector<1x128xf32>
      %cst_18 = arith.constant 2.250000e+01 : f32
      %32 = vector.broadcast %cst_18 : f32 to vector<2x128xf32>
      %33 = arith.mulf %17, %32 : vector<2x128xf32>
      %34 = vector.broadcast %31 : vector<1x128xf32> to vector<2x128xf32>
      %35 = arith.addf %34, %33 : vector<2x128xf32>
      %36 = arith.mulf %30, %35 : vector<2x128xf32>
      %cst_19 = arith.constant dense<0.000000e+00> : vector<2xf32>
      %37 = vector.multi_reduction <add>, %36, %cst_19 [1] : vector<2x128xf32> to vector<2xf32>
      %38 = vector.shape_cast %37 : vector<2xf32> to vector<1x2xf32>
      %c0_20 = arith.constant 0 : index
      %c0_21 = arith.constant 0 : index
      %39 = vector.load %arg6[%c0_20, %c0_21] : memref<1x2xf32, #tpu.memory_space<vmem>>, vector<1x2xf32>
      tpu.vector_store %arg6[%c0_20, %c0_21], %38 {strides = array<i32>} : memref<1x2xf32, #tpu.memory_space<vmem>>, vector<1x2xf32>,
    } else {
    }
    return
  }
  func.func @transform_0(%arg0: i32, %arg1: i32) -> (i32, i32) {
    %c0_i32 = arith.constant 0 : i32
    return %arg0, %arg1 : i32, i32
  }
  func.func @transform_1(%arg0: i32, %arg1: i32) -> (i32, i32) {
    %c0_i32 = arith.constant 0 : i32
    %c0_i32_0 = arith.constant 0 : i32
    return %arg1, %c0_i32 : i32, i32
  }
  func.func @transform_2(%arg0: i32, %arg1: i32) -> (i32, i32) {
    %c0_i32 = arith.constant 0 : i32
    %c0_i32_0 = arith.constant 0 : i32
    %c0_i32_1 = arith.constant 0 : i32
    return %c0_i32, %c0_i32_0 : i32, i32
  }
  func.func @transform_3(%arg0: i32, %arg1: i32) -> (i32, i32) {
    %c0_i32 = arith.constant 0 : i32
    %c0_i32_0 = arith.constant 0 : i32
    %c0_i32_1 = arith.constant 0 : i32
    return %c0_i32, %c0_i32_0 : i32, i32
  }
  func.func @transform_4(%arg0: i32, %arg1: i32) -> (i32, i32) {
    %c0_i32 = arith.constant 0 : i32
    %c0_i32_0 = arith.constant 0 : i32
    return %arg0, %c0_i32 : i32, i32
  }
}

</mosaic_0001>

<llo_original>
// kernel: tpu_custom_call.1
$region0: #{tpu_custom_call.1}
  #allocation0 [shape = 'u32[]', space=smem, size = 0x4, offset = 0x4, fixed_abs, tag = 'smem constant byte address 0x4 - core index']
  #allocation1 [shape = 'u32[72,128]{1,0:T(1,128)}', space=vmem, size = 0x9000, scoped, tag = 'internal scratch']
  #allocation2 [shape = 'f32[2,256]{1,0:T(2,128)}', space=vmem, size = 0x800, scoped, tag = 'scratch operand']
  %s0 = inlined_call_operand.hbm [shape: f32[2,1024], index: 0, kind: input, shape index: {}]
  %s1 = inlined_call_operand.hbm [shape: f32[1024,256], index: 1, kind: input, shape index: {}]
  %s2 = inlined_call_operand.hbm [shape: f32[1,256], index: 2, kind: input, shape index: {}]
  %s3 = inlined_call_operand.vmem [shape: f32[1,128], index: 3, kind: input, shape index: {}]
  %s4 = inlined_call_operand.hbm [shape: f32[1,2], index: 4, kind: output, shape index: {}]
  %s5 = sld [smem:[#allocation0]]
  $region46: #{tpu_custom_call.1} parent=0
    _
  %s7 = ssub.s32 1, %s5
  %s8 = scalar_select 0, %s7, %s5
  $region1: #{tpu_custom_call.1} parent=0
    #allocation3 [shape = 'u8[8192]{0}', space=vmem, size = 0x2000, scoped, tag = 'input window, operand 0, single buffered']
    #allocation4 [shape = 's32[1]{0}', space=sflag, size = 0x4, scoped, tag = 'scoped memory for tpu_custom_call.1']
    #allocation5 [shape = 's32[1]{0}', space=sflag, size = 0x4, scoped, tag = 'scoped memory for tpu_custom_call.1']
    #allocation6 [shape = 'u8[1048576]{0}', space=vmem, size = 0x100000, scoped, tag = 'input window, operand 1, single buffered']
    #allocation7 [shape = 's32[1]{0}', space=sflag, size = 0x4, scoped, tag = 'scoped memory for tpu_custom_call.1']
    #allocation8 [shape = 'u8[1024]{0}', space=vmem, size = 0x400, scoped, tag = 'input window, operand 2, single buffered']
    #allocation9 [shape = 'u8[512]{0}', space=vmem, size = 0x400, scoped, tag = 'output window, operand 0, single buffered']
    %9 = vsyncpa [#allocation4], 0
    %10 = vsyncpa [#allocation7], 0
    %11 = vsyncpa [#allocation5], 0
    // Predicated region
    $region2: #{tpu_custom_call.1} parent=1 // pred_check
      _
    $region3: #{tpu_custom_call.1} parent=1 // pred_check_branch
      %13 = sbr.rel (0) target = $region5
    $region4: #{tpu_custom_call.1} parent=1 // pred_region
      %15 = vsyncadd [#allocation4], 0
      %s17 = sshll.u32 %s0, 4
      %s18 = int_to_ptr.hbm [resolvable:$true] %s17
      %s19 = sshll.u32 [#allocation3], 4
      %s20 = int_to_ptr.vmem [resolvable:$true] %s19
      %22 = dma.hbm_to_vmem [thread:$0]  %s18, 256, %s20, [#allocation4]
    $region5: #{tpu_custom_call.1} parent=1 // pred_fallthru
      _
    // Predicated region
    $region6: #{tpu_custom_call.1} parent=1 // pred_check
      _
    $region7: #{tpu_custom_call.1} parent=1 // pred_check_branch
      %24 = sbr.rel (0) target = $region9
    $region8: #{tpu_custom_call.1} parent=1 // pred_region
      %26 = vsyncadd [#allocation7], 0
      %s27 = sshll.u32 %s1, 4
      %s28 = int_to_ptr.hbm [resolvable:$true] %s27
      %s29 = sshll.u32 [#allocation6], 4
      %s30 = int_to_ptr.vmem [resolvable:$true] %s29
      %35 = dma.hbm_to_vmem [thread:$0]  %s28, 32768, %s30, [#allocation7], 256, 256, 16
    $region9: #{tpu_custom_call.1} parent=1 // pred_fallthru
      _
    // Predicated region
    $region10: #{tpu_custom_call.1} parent=1 // pred_check
      _
    $region11: #{tpu_custom_call.1} parent=1 // pred_check_branch
      %37 = sbr.rel (0) target = $region13
    $region12: #{tpu_custom_call.1} parent=1 // pred_region
      %39 = vsyncadd [#allocation7], 0
      %s41 = sshll.u32 %s2, 4
      %s42 = int_to_ptr.hbm [resolvable:$true] %s41
      %s43 = sshll.u32 [#allocation8], 4
      %s44 = int_to_ptr.vmem [resolvable:$true] %s43
      %46 = dma.hbm_to_vmem [thread:$0]  %s42, 32, %s44, [#allocation7]
    $region13: #{tpu_custom_call.1} parent=1 // pred_fallthru
      _
    // Predicated region
    $region14: #{tpu_custom_call.1} parent=1 // pred_check
      _
    $region15: #{tpu_custom_call.1} parent=1 // pred_check_branch
      %48 = sbr.rel (0) target = $region17
    $region16: #{tpu_custom_call.1} parent=1 // pred_region
      _
    $region17: #{tpu_custom_call.1} parent=1 // pred_fallthru
      _
    // Predicated region
    $region18: #{tpu_custom_call.1} parent=1 // pred_check
      _
    $region19: #{tpu_custom_call.1} parent=1 // pred_check_branch
      %50 = sbr.rel (0) target = $region21
    $region20: #{tpu_custom_call.1} parent=1 // pred_region
      %52 = dma.done [#allocation4], 256
    $region21: #{tpu_custom_call.1} parent=1 // pred_fallthru
      _
    // Predicated region
    $region22: #{tpu_custom_call.1} parent=1 // pred_check
      _
    $region23: #{tpu_custom_call.1} parent=1 // pred_check_branch
      %54 = sbr.rel (0) target = $region25
    $region24: #{tpu_custom_call.1} parent=1 // pred_region
      %56 = dma.done [#allocation7], 32768
    $region25: #{tpu_custom_call.1} parent=1 // pred_fallthru
      _
    // Predicated region
    $region26: #{tpu_custom_call.1} parent=1 // pred_check
      _
    $region27: #{tpu_custom_call.1} parent=1 // pred_check_branch
      %58 = sbr.rel (0) target = $region29
    $region28: #{tpu_custom_call.1} parent=1 // pred_region
      %60 = dma.done [#allocation7], 32
    $region29: #{tpu_custom_call.1} parent=1 // pred_fallthru
      _
    %p61 = scmp.eq.s32.totalorder 0, 0
    // Predicated region
    $region30: #{tpu_custom_call.1} parent=1 // pred_check
      %p62 = pneg %p61
    $region31: #{tpu_custom_call.1} parent=1 // pred_check_branch
      %64 = sbr.rel (%p62) target = $region33
    $region32: #{tpu_custom_call.1} parent=1 // pred_region
      %65 = vst [vmem:[#allocation2] sm:$0xf] 0.0
    $region33: #{tpu_custom_call.1} parent=1 // pred_fallthru
      _
    %v66 = vld [vmem:[#allocation3] sm:$0xff]
    %v67 = vld [vmem:[#allocation3 + $0x8] sm:$0xff]
    %v68 = vld [vmem:[#allocation2] sm:$0xf]
    %v69 = vld [vmem:[#allocation6] sm:$0xff]
    %v70 = vld [vmem:[#allocation6 + $0x8] sm:$0xff]
    %v71 = vld [vmem:[#allocation6 + $0x10] sm:$0xff]
    %v72 = vld [vmem:[#allocation6 + $0x18] sm:$0xff]
    %v73 = vld [vmem:[#allocation6 + $0x20] sm:$0xff]
    %v74 = vld [vmem:[#allocation6 + $0x28] sm:$0xff]
    %v75 = vld [vmem:[#allocation6 + $0x30] sm:$0xff]
    %v76 = vld [vmem:[#allocation6 + $0x38] sm:$0xff]
    %v77 = vld [vmem:[#allocation6 + $0x40] sm:$0xff]
    %v78 = vld [vmem:[#allocation6 + $0x48] sm:$0xff]
    %v79 = vld [vmem:[#allocation6 + $0x50] sm:$0xff]
    %v80 = vld [vmem:[#allocation6 + $0x58] sm:$0xff]
    %v81 = vld [vmem:[#allocation6 + $0x60] sm:$0xff]
    %v82 = vld [vmem:[#allocation6 + $0x68] sm:$0xff]
    %v83 = vld [vmem:[#allocation6 + $0x70] sm:$0xff]
    %v84 = vld [vmem:[#allocation6 + $0x78] sm:$0xff]
    %v85 = vld [vmem:[#allocation6 + $0x80] sm:$0xff]
    %v86 = vld [vmem:[#allocation6 + $0x88] sm:$0xff]
    %v87 = vld [vmem:[#allocation6 + $0x90] sm:$0xff]
    %v88 = vld [vmem:[#allocation6 + $0x98] sm:$0xff]
    %v89 = vld [vmem:[#allocation6 + $0xa0] sm:$0xff]
    %v90 = vld [vmem:[#allocation6 + $0xa8] sm:$0xff]
    %v91 = vld [vmem:[#allocation6 + $0xb0] sm:$0xff]
    %v92 = vld [vmem:[#allocation6 + $0xb8] sm:$0xff]
    %v93 = vld [vmem:[#allocation6 + $0xc0] sm:$0xff]
    %v94 = vld [vmem:[#allocation6 + $0xc8] sm:$0xff]
    %v95 = vld [vmem:[#allocation6 + $0xd0] sm:$0xff]
    %v96 = vld [vmem:[#allocation6 + $0xd8] sm:$0xff]
    %v97 = vld [vmem:[#allocation6 + $0xe0] sm:$0xff]
    %v98 = vld [vmem:[#allocation6 + $0xe8] sm:$0xff]
    %v99 = vld [vmem:[#allocation6 + $0xf0] sm:$0xff]
    %v100 = vld [vmem:[#allocation6 + $0xf8] sm:$0xff]
    %v101 = vld [vmem:[#allocation6 + $0x100] sm:$0xff]
    %v102 = vld [vmem:[#allocation6 + $0x108] sm:$0xff]
    %v103 = vld [vmem:[#allocation6 + $0x110] sm:$0xff]
    %v104 = vld [vmem:[#allocation6 + $0x118] sm:$0xff]
    %v105 = vld [vmem:[#allocation6 + $0x120] sm:$0xff]
    %v106 = vld [vmem:[#allocation6 + $0x128] sm:$0xff]
    %v107 = vld [vmem:[#allocation6 + $0x130] sm:$0xff]
    %v108 = vld [vmem:[#allocation6 + $0x138] sm:$0xff]
    %v109 = vld [vmem:[#allocation6 + $0x140] sm:$0xff]
    %v110 = vld [vmem:[#allocation6 + $0x148] sm:$0xff]
    %v111 = vld [vmem:[#allocation6 + $0x150] sm:$0xff]
    %v112 = vld [vmem:[#allocation6 + $0x158] sm:$0xff]
    %v113 = vld [vmem:[#allocation6 + $0x160] sm:$0xff]
    %v114 = vld [vmem:[#allocation6 + $0x168] sm:$0xff]
    %v115 = vld [vmem:[#allocation6 + $0x170] sm:$0xff]
    %v116 = vld [vmem:[#allocation6 + $0x178] sm:$0xff]
    %v117 = vld [vmem:[#allocation6 + $0x180] sm:$0xff]
    %v118 = vld [vmem:[#allocation6 + $0x188] sm:$0xff]
    %v119 = vld [vmem:[#allocation6 + $0x190] sm:$0xff]
    %v120 = vld [vmem:[#allocation6 + $0x198] sm:$0xff]
    %v121 = vld [vmem:[#allocation6 + $0x1a0] sm:$0xff]
    %v122 = vld [vmem:[#allocation6 + $0x1a8] sm:$0xff]
    %v123 = vld [vmem:[#allocation6 + $0x1b0] sm:$0xff]
    %v124 = vld [vmem:[#allocation6 + $0x1b8] sm:$0xff]
    %v125 = vld [vmem:[#allocation6 + $0x1c0] sm:$0xff]
    %v126 = vld [vmem:[#allocation6 + $0x1c8] sm:$0xff]
    %v127 = vld [vmem:[#allocation6 + $0x1d0] sm:$0xff]
    %v128 = vld [vmem:[#allocation6 + $0x1d8] sm:$0xff]
    %v129 = vld [vmem:[#allocation6 + $0x1e0] sm:$0xff]
    %v130 = vld [vmem:[#allocation6 + $0x1e8] sm:$0xff]
    %v131 = vld [vmem:[#allocation6 + $0x1f0] sm:$0xff]
    %v132 = vld [vmem:[#allocation6 + $0x1f8] sm:$0xff]
    %v133 = vld [vmem:[#allocation6 + $0x200] sm:$0xff]
    %v134 = vld [vmem:[#allocation6 + $0x208] sm:$0xff]
    %v135 = vld [vmem:[#allocation6 + $0x210] sm:$0xff]
    %v136 = vld [vmem:[#allocation6 + $0x218] sm:$0xff]
    %v137 = vld [vmem:[#allocation6 + $0x220] sm:$0xff]
    %v138 = vld [vmem:[#allocation6 + $0x228] sm:$0xff]
    %v139 = vld [vmem:[#allocation6 + $0x230] sm:$0xff]
    %v140 = vld [vmem:[#allocation6 + $0x238] sm:$0xff]
    %v141 = vld [vmem:[#allocation6 + $0x240] sm:$0xff]
    %v142 = vld [vmem:[#allocation6 + $0x248] sm:$0xff]
    %v143 = vld [vmem:[#allocation6 + $0x250] sm:$0xff]
    %v144 = vld [vmem:[#allocation6 + $0x258] sm:$0xff]
    %v145 = vld [vmem:[#allocation6 + $0x260] sm:$0xff]
    %v146 = vld [vmem:[#allocation6 + $0x268] sm:$0xff]
    %v147 = vld [vmem:[#allocation6 + $0x270] sm:$0xff]
    %v148 = vld [vmem:[#allocation6 + $0x278] sm:$0xff]
    %v149 = vld [vmem:[#allocation6 + $0x280] sm:$0xff]
    %v150 = vld [vmem:[#allocation6 + $0x288] sm:$0xff]
    %v151 = vld [vmem:[#allocation6 + $0x290] sm:$0xff]
    %v152 = vld [vmem:[#allocation6 + $0x298] sm:$0xff]
    %v153 = vld [vmem:[#allocation6 + $0x2a0] sm:$0xff]
    %v154 = vld [vmem:[#allocation6 + $0x2a8] sm:$0xff]
    %v155 = vld [vmem:[#allocation6 + $0x2b0] sm:$0xff]
    %v156 = vld [vmem:[#allocation6 + $0x2b8] sm:$0xff]
    %v157 = vld [vmem:[#allocation6 + $0x2c0] sm:$0xff]
    %v158 = vld [vmem:[#allocation6 + $0x2c8] sm:$0xff]
    %v159 = vld [vmem:[#allocation6 + $0x2d0] sm:$0xff]
    %v160 = vld [vmem:[#allocation6 + $0x2d8] sm:$0xff]
    %v161 = vld [vmem:[#allocation6 + $0x2e0] sm:$0xff]
    %v162 = vld [vmem:[#allocation6 + $0x2e8] sm:$0xff]
    %v163 = vld [vmem:[#allocation6 + $0x2f0] sm:$0xff]
    %v164 = vld [vmem:[#allocation6 + $0x2f8] sm:$0xff]
    %v165 = vld [vmem:[#allocation6 + $0x300] sm:$0xff]
    %v166 = vld [vmem:[#allocation6 + $0x308] sm:$0xff]
    %v167 = vld [vmem:[#allocation6 + $0x310] sm:$0xff]
    %v168 = vld [vmem:[#allocation6 + $0x318] sm:$0xff]
    %v169 = vld [vmem:[#allocation6 + $0x320] sm:$0xff]
    %v170 = vld [vmem:[#allocation6 + $0x328] sm:$0xff]
    %v171 = vld [vmem:[#allocation6 + $0x330] sm:$0xff]
    %v172 = vld [vmem:[#allocation6 + $0x338] sm:$0xff]
    %v173 = vld [vmem:[#allocation6 + $0x340] sm:$0xff]
    %v174 = vld [vmem:[#allocation6 + $0x348] sm:$0xff]
    %v175 = vld [vmem:[#allocation6 + $0x350] sm:$0xff]
    %v176 = vld [vmem:[#allocation6 + $0x358] sm:$0xff]
    %v177 = vld [vmem:[#allocation6 + $0x360] sm:$0xff]
    %v178 = vld [vmem:[#allocation6 + $0x368] sm:$0xff]
    %v179 = vld [vmem:[#allocation6 + $0x370] sm:$0xff]
    %v180 = vld [vmem:[#allocation6 + $0x378] sm:$0xff]
    %v181 = vld [vmem:[#allocation6 + $0x380] sm:$0xff]
    %v182 = vld [vmem:[#allocation6 + $0x388] sm:$0xff]
    %v183 = vld [vmem:[#allocation6 + $0x390] sm:$0xff]
    %v184 = vld [vmem:[#allocation6 + $0x398] sm:$0xff]
    %v185 = vld [vmem:[#allocation6 + $0x3a0] sm:$0xff]
    %v186 = vld [vmem:[#allocation6 + $0x3a8] sm:$0xff]
    %v187 = vld [vmem:[#allocation6 + $0x3b0] sm:$0xff]
    %v188 = vld [vmem:[#allocation6 + $0x3b8] sm:$0xff]
    %v189 = vld [vmem:[#allocation6 + $0x3c0] sm:$0xff]
    %v190 = vld [vmem:[#allocation6 + $0x3c8] sm:$0xff]
    %v191 = vld [vmem:[#allocation6 + $0x3d0] sm:$0xff]
    %v192 = vld [vmem:[#allocation6 + $0x3d8] sm:$0xff]
    %v193 = vld [vmem:[#allocation6 + $0x3e0] sm:$0xff]
    %v194 = vld [vmem:[#allocation6 + $0x3e8] sm:$0xff]
    %v195 = vld [vmem:[#allocation6 + $0x3f0] sm:$0xff]
    %v196 = vld [vmem:[#allocation6 + $0x3f8] sm:$0xff]
    %v197 = vld [vmem:[#allocation6 + $0x400] sm:$0xff]
    %v198 = vld [vmem:[#allocation6 + $0x408] sm:$0xff]
    %v199 = vld [vmem:[#allocation6 + $0x410] sm:$0xff]
    %v200 = vld [vmem:[#allocation6 + $0x418] sm:$0xff]
    %v201 = vld [vmem:[#allocation6 + $0x420] sm:$0xff]
    %v202 = vld [vmem:[#allocation6 + $0x428] sm:$0xff]
    %v203 = vld [vmem:[#allocation6 + $0x430] sm:$0xff]
    %v204 = vld [vmem:[#allocation6 + $0x438] sm:$0xff]
    %v205 = vld [vmem:[#allocation6 + $0x440] sm:$0xff]
    %v206 = vld [vmem:[#allocation6 + $0x448] sm:$0xff]
    %v207 = vld [vmem:[#allocation6 + $0x450] sm:$0xff]
    %v208 = vld [vmem:[#allocation6 + $0x458] sm:$0xff]
    %v209 = vld [vmem:[#allocation6 + $0x460] sm:$0xff]
    %v210 = vld [vmem:[#allocation6 + $0x468] sm:$0xff]
    %v211 = vld [vmem:[#allocation6 + $0x470] sm:$0xff]
    %v212 = vld [vmem:[#allocation6 + $0x478] sm:$0xff]
    %v213 = vld [vmem:[#allocation6 + $0x480] sm:$0xff]
    %v214 = vld [vmem:[#allocation6 + $0x488] sm:$0xff]
    %v215 = vld [vmem:[#allocation6 + $0x490] sm:$0xff]
    %v216 = vld [vmem:[#allocation6 + $0x498] sm:$0xff]
    %v217 = vld [vmem:[#allocation6 + $0x4a0] sm:$0xff]
    %v218 = vld [vmem:[#allocation6 + $0x4a8] sm:$0xff]
    %v219 = vld [vmem:[#allocation6 + $0x4b0] sm:$0xff]
    %v220 = vld [vmem:[#allocation6 + $0x4b8] sm:$0xff]
    %v221 = vld [vmem:[#allocation6 + $0x4c0] sm:$0xff]
    %v222 = vld [vmem:[#allocation6 + $0x4c8] sm:$0xff]
    %v223 = vld [vmem:[#allocation6 + $0x4d0] sm:$0xff]
    %v224 = vld [vmem:[#allocation6 + $0x4d8] sm:$0xff]
    %v225 = vld [vmem:[#allocation6 + $0x4e0] sm:$0xff]
    %v226 = vld [vmem:[#allocation6 + $0x4e8] sm:$0xff]
    %v227 = vld [vmem:[#allocation6 + $0x4f0] sm:$0xff]
    %v228 = vld [vmem:[#allocation6 + $0x4f8] sm:$0xff]
    %v229 = vld [vmem:[#allocation6 + $0x500] sm:$0xff]
    %v230 = vld [vmem:[#allocation6 + $0x508] sm:$0xff]
    %v231 = vld [vmem:[#allocation6 + $0x510] sm:$0xff]
    %v232 = vld [vmem:[#allocation6 + $0x518] sm:$0xff]
    %v233 = vld [vmem:[#allocation6 + $0x520] sm:$0xff]
    %v234 = vld [vmem:[#allocation6 + $0x528] sm:$0xff]
    %v235 = vld [vmem:[#allocation6 + $0x530] sm:$0xff]
    %v236 = vld [vmem:[#allocation6 + $0x538] sm:$0xff]
    %v237 = vld [vmem:[#allocation6 + $0x540] sm:$0xff]
    %v238 = vld [vmem:[#allocation6 + $0x548] sm:$0xff]
    %v239 = vld [vmem:[#allocation6 + $0x550] sm:$0xff]
    %v240 = vld [vmem:[#allocation6 + $0x558] sm:$0xff]
    %v241 = vld [vmem:[#allocation6 + $0x560] sm:$0xff]
    %v242 = vld [vmem:[#allocation6 + $0x568] sm:$0xff]
    %v243 = vld [vmem:[#allocation6 + $0x570] sm:$0xff]
    %v244 = vld [vmem:[#allocation6 + $0x578] sm:$0xff]
    %v245 = vld [vmem:[#allocation6 + $0x580] sm:$0xff]
    %v246 = vld [vmem:[#allocation6 + $0x588] sm:$0xff]
    %v247 = vld [vmem:[#allocation6 + $0x590] sm:$0xff]
    %v248 = vld [vmem:[#allocation6 + $0x598] sm:$0xff]
    %v249 = vld [vmem:[#allocation6 + $0x5a0] sm:$0xff]
    %v250 = vld [vmem:[#allocation6 + $0x5a8] sm:$0xff]
    %v251 = vld [vmem:[#allocation6 + $0x5b0] sm:$0xff]
    %v252 = vld [vmem:[#allocation6 + $0x5b8] sm:$0xff]
    %v253 = vld [vmem:[#allocation6 + $0x5c0] sm:$0xff]
    %v254 = vld [vmem:[#allocation6 + $0x5c8] sm:$0xff]
    %v255 = vld [vmem:[#allocation6 + $0x5d0] sm:$0xff]
    %v256 = vld [vmem:[#allocation6 + $0x5d8] sm:$0xff]
    %v257 = vld [vmem:[#allocation6 + $0x5e0] sm:$0xff]
    %v258 = vld [vmem:[#allocation6 + $0x5e8] sm:$0xff]
    %v259 = vld [vmem:[#allocation6 + $0x5f0] sm:$0xff]
    %v260 = vld [vmem:[#allocation6 + $0x5f8] sm:$0xff]
    %v261 = vld [vmem:[#allocation6 + $0x600] sm:$0xff]
    %v262 = vld [vmem:[#allocation6 + $0x608] sm:$0xff]
    %v263 = vld [vmem:[#allocation6 + $0x610] sm:$0xff]
    %v264 = vld [vmem:[#allocation6 + $0x618] sm:$0xff]
    %v265 = vld [vmem:[#allocation6 + $0x620] sm:$0xff]
    %v266 = vld [vmem:[#allocation6 + $0x628] sm:$0xff]
    %v267 = vld [vmem:[#allocation6 + $0x630] sm:$0xff]
    %v268 = vld [vmem:[#allocation6 + $0x638] sm:$0xff]
    %v269 = vld [vmem:[#allocation6 + $0x640] sm:$0xff]
    %v270 = vld [vmem:[#allocation6 + $0x648] sm:$0xff]
    %v271 = vld [vmem:[#allocation6 + $0x650] sm:$0xff]
    %v272 = vld [vmem:[#allocation6 + $0x658] sm:$0xff]
    %v273 = vld [vmem:[#allocation6 + $0x660] sm:$0xff]
    %v274 = vld [vmem:[#allocation6 + $0x668] sm:$0xff]
    %v275 = vld [vmem:[#allocation6 + $0x670] sm:$0xff]
    %v276 = vld [vmem:[#allocation6 + $0x678] sm:$0xff]
    %v277 = vld [vmem:[#allocation6 + $0x680] sm:$0xff]
    %v278 = vld [vmem:[#allocation6 + $0x688] sm:$0xff]
    %v279 = vld [vmem:[#allocation6 + $0x690] sm:$0xff]
    %v280 = vld [vmem:[#allocation6 + $0x698] sm:$0xff]
    %v281 = vld [vmem:[#allocation6 + $0x6a0] sm:$0xff]
    %v282 = vld [vmem:[#allocation6 + $0x6a8] sm:$0xff]
    %v283 = vld [vmem:[#allocation6 + $0x6b0] sm:$0xff]
    %v284 = vld [vmem:[#allocation6 + $0x6b8] sm:$0xff]
    %v285 = vld [vmem:[#allocation6 + $0x6c0] sm:$0xff]
    %v286 = vld [vmem:[#allocation6 + $0x6c8] sm:$0xff]
    %v287 = vld [vmem:[#allocation6 + $0x6d0] sm:$0xff]
    %v288 = vld [vmem:[#allocation6 + $0x6d8] sm:$0xff]
    %v289 = vld [vmem:[#allocation6 + $0x6e0] sm:$0xff]
    %v290 = vld [vmem:[#allocation6 + $0x6e8] sm:$0xff]
    %v291 = vld [vmem:[#allocation6 + $0x6f0] sm:$0xff]
    %v292 = vld [vmem:[#allocation6 + $0x6f8] sm:$0xff]
    %v293 = vld [vmem:[#allocation6 + $0x700] sm:$0xff]
    %v294 = vld [vmem:[#allocation6 + $0x708] sm:$0xff]
    %v295 = vld [vmem:[#allocation6 + $0x710] sm:$0xff]
    %v296 = vld [vmem:[#allocation6 + $0x718] sm:$0xff]
    %v297 = vld [vmem:[#allocation6 + $0x720] sm:$0xff]
    %v298 = vld [vmem:[#allocation6 + $0x728] sm:$0xff]
    %v299 = vld [vmem:[#allocation6 + $0x730] sm:$0xff]
    %v300 = vld [vmem:[#allocation6 + $0x738] sm:$0xff]
    %v301 = vld [vmem:[#allocation6 + $0x740] sm:$0xff]
    %v302 = vld [vmem:[#allocation6 + $0x748] sm:$0xff]
    %v303 = vld [vmem:[#allocation6 + $0x750] sm:$0xff]
    %v304 = vld [vmem:[#allocation6 + $0x758] sm:$0xff]
    %v305 = vld [vmem:[#allocation6 + $0x760] sm:$0xff]
    %v306 = vld [vmem:[#allocation6 + $0x768] sm:$0xff]
    %v307 = vld [vmem:[#allocation6 + $0x770] sm:$0xff]
    %v308 = vld [vmem:[#allocation6 + $0x778] sm:$0xff]
    %v309 = vld [vmem:[#allocation6 + $0x780] sm:$0xff]
    %v310 = vld [vmem:[#allocation6 + $0x788] sm:$0xff]
    %v311 = vld [vmem:[#allocation6 + $0x790] sm:$0xff]
    %v312 = vld [vmem:[#allocation6 + $0x798] sm:$0xff]
    %v313 = vld [vmem:[#allocation6 + $0x7a0] sm:$0xff]
    %v314 = vld [vmem:[#allocation6 + $0x7a8] sm:$0xff]
    %v315 = vld [vmem:[#allocation6 + $0x7b0] sm:$0xff]
    %v316 = vld [vmem:[#allocation6 + $0x7b8] sm:$0xff]
    %v317 = vld [vmem:[#allocation6 + $0x7c0] sm:$0xff]
    %v318 = vld [vmem:[#allocation6 + $0x7c8] sm:$0xff]
    %v319 = vld [vmem:[#allocation6 + $0x7d0] sm:$0xff]
    %v320 = vld [vmem:[#allocation6 + $0x7d8] sm:$0xff]
    %v321 = vld [vmem:[#allocation6 + $0x7e0] sm:$0xff]
    %v322 = vld [vmem:[#allocation6 + $0x7e8] sm:$0xff]
    %v323 = vld [vmem:[#allocation6 + $0x7f0] sm:$0xff]
    %v324 = vld [vmem:[#allocation6 + $0x7f8] sm:$0xff]
    %327 = vst [vmem:[#allocation1] ss:$4 sm:$0xff] %v66
    %s328 = scalar_lea.vmem [#allocation1], 32
    %329 = vst [vmem:[%s328] ss:$4 sm:$0xff] %v67
    %v330 = vld.sshfl [vmem:[#allocation1] sm:$0xff pattern:$0x73625140]
    %v331 = vld.sshfl [vmem:[#allocation1 + $0x8] sm:$0xff pattern:$0x73625140]
    %v332 = vld.sshfl [vmem:[#allocation1 + $0x10] sm:$0xff pattern:$0x73625140]
    %v333 = vld.sshfl [vmem:[#allocation1 + $0x18] sm:$0xff pattern:$0x73625140]
    %v334 = vld.sshfl [vmem:[#allocation1 + $0x20] sm:$0xff pattern:$0x73625140]
    %v335 = vld.sshfl [vmem:[#allocation1 + $0x28] sm:$0xff pattern:$0x73625140]
    %v336 = vld.sshfl [vmem:[#allocation1 + $0x30] sm:$0xff pattern:$0x73625140]
    %v337 = vld.sshfl [vmem:[#allocation1 + $0x38] sm:$0xff pattern:$0x73625140]
    %346 = vmatpush.msra.mxu0 %v99
    %347 = vmatpush.msra.mxu0 %v97
    %348 = vmatpush.msra.mxu0 %v95
    %349 = vmatpush.msra.mxu0 %v93
    %350 = vmatpush.msra.mxu0 %v91
    %351 = vmatpush.msra.mxu0 %v89
    %352 = vmatpush.msra.mxu0 %v87
    %353 = vmatpush.msra.mxu0 %v85
    %354 = vmatpush.msra.mxu0 %v83
    %355 = vmatpush.msra.mxu0 %v81
    %356 = vmatpush.msra.mxu0 %v79
    %357 = vmatpush.msra.mxu0 %v77
    %358 = vmatpush.msra.mxu0 %v75
    %359 = vmatpush.msra.mxu0 %v73
    %360 = vmatpush.msra.mxu0 %v71
    %361 = vmatpush.msra.mxu0 %v69
    %362 = vmatmul.f32.gmra.mxu0 %v330
    %v363 = vpop.f32.mrf.mxu0
    %v364 = vadd.f32 0.0, %v363
    %365 = vdwg.mxu0
    %366 = vmatpush.msra.mxu0 %v131
    %367 = vmatpush.msra.mxu0 %v129
    %368 = vmatpush.msra.mxu0 %v127
    %369 = vmatpush.msra.mxu0 %v125
    %370 = vmatpush.msra.mxu0 %v123
    %371 = vmatpush.msra.mxu0 %v121
    %372 = vmatpush.msra.mxu0 %v119
    %373 = vmatpush.msra.mxu0 %v117
    %374 = vmatpush.msra.mxu0 %v115
    %375 = vmatpush.msra.mxu0 %v113
    %376 = vmatpush.msra.mxu0 %v111
    %377 = vmatpush.msra.mxu0 %v109
    %378 = vmatpush.msra.mxu0 %v107
    %379 = vmatpush.msra.mxu0 %v105
    %380 = vmatpush.msra.mxu0 %v103
    %381 = vmatpush.msra.mxu0 %v101
    %382 = vmatmul.f32.gmra.mxu0 %v331
    %v383 = vpop.f32.mrf.mxu0
    %v384 = vadd.f32 %v364, %v383
    %385 = vdwg.mxu0
    %386 = vmatpush.msra.mxu0 %v163
    %387 = vmatpush.msra.mxu0 %v161
    %388 = vmatpush.msra.mxu0 %v159
    %389 = vmatpush.msra.mxu0 %v157
    %390 = vmatpush.msra.mxu0 %v155
    %391 = vmatpush.msra.mxu0 %v153
    %392 = vmatpush.msra.mxu0 %v151
    %393 = vmatpush.msra.mxu0 %v149
    %394 = vmatpush.msra.mxu0 %v147
    %395 = vmatpush.msra.mxu0 %v145
    %396 = vmatpush.msra.mxu0 %v143
    %397 = vmatpush.msra.mxu0 %v141
    %398 = vmatpush.msra.mxu0 %v139
    %399 = vmatpush.msra.mxu0 %v137
    %400 = vmatpush.msra.mxu0 %v135
    %401 = vmatpush.msra.mxu0 %v133
    %402 = vmatmul.f32.gmra.mxu0 %v332
    %v403 = vpop.f32.mrf.mxu0
    %v404 = vadd.f32 %v384, %v403
    %405 = vdwg.mxu0
    %406 = vmatpush.msra.mxu0 %v195
    %407 = vmatpush.msra.mxu0 %v193
    %408 = vmatpush.msra.mxu0 %v191
    %409 = vmatpush.msra.mxu0 %v189
    %410 = vmatpush.msra.mxu0 %v187
    %411 = vmatpush.msra.mxu0 %v185
    %412 = vmatpush.msra.mxu0 %v183
    %413 = vmatpush.msra.mxu0 %v181
    %414 = vmatpush.msra.mxu0 %v179
    %415 = vmatpush.msra.mxu0 %v177
    %416 = vmatpush.msra.mxu0 %v175
    %417 = vmatpush.msra.mxu0 %v173
    %418 = vmatpush.msra.mxu0 %v171
    %419 = vmatpush.msra.mxu0 %v169
    %420 = vmatpush.msra.mxu0 %v167
    %421 = vmatpush.msra.mxu0 %v165
    %422 = vmatmul.f32.gmra.mxu0 %v333
    %v423 = vpop.f32.mrf.mxu0
    %v424 = vadd.f32 %v404, %v423
    %425 = vdwg.mxu0
    %426 = vmatpush.msra.mxu0 %v227
    %427 = vmatpush.msra.mxu0 %v225
    %428 = vmatpush.msra.mxu0 %v223
    %429 = vmatpush.msra.mxu0 %v221
    %430 = vmatpush.msra.mxu0 %v219
    %431 = vmatpush.msra.mxu0 %v217
    %432 = vmatpush.msra.mxu0 %v215
    %433 = vmatpush.msra.mxu0 %v213
    %434 = vmatpush.msra.mxu0 %v211
    %435 = vmatpush.msra.mxu0 %v209
    %436 = vmatpush.msra.mxu0 %v207
    %437 = vmatpush.msra.mxu0 %v205
    %438 = vmatpush.msra.mxu0 %v203
    %439 = vmatpush.msra.mxu0 %v201
    %440 = vmatpush.msra.mxu0 %v199
    %441 = vmatpush.msra.mxu0 %v197
    %442 = vmatmul.f32.gmra.mxu0 %v334
    %v443 = vpop.f32.mrf.mxu0
    %v444 = vadd.f32 %v424, %v443
    %445 = vdwg.mxu0
    %446 = vmatpush.msra.mxu0 %v259
    %447 = vmatpush.msra.mxu0 %v257
    %448 = vmatpush.msra.mxu0 %v255
    %449 = vmatpush.msra.mxu0 %v253
    %450 = vmatpush.msra.mxu0 %v251
    %451 = vmatpush.msra.mxu0 %v249
    %452 = vmatpush.msra.mxu0 %v247
    %453 = vmatpush.msra.mxu0 %v245
    %454 = vmatpush.msra.mxu0 %v243
    %455 = vmatpush.msra.mxu0 %v241
    %456 = vmatpush.msra.mxu0 %v239
    %457 = vmatpush.msra.mxu0 %v237
    %458 = vmatpush.msra.mxu0 %v235
    %459 = vmatpush.msra.mxu0 %v233
    %460 = vmatpush.msra.mxu0 %v231
    %461 = vmatpush.msra.mxu0 %v229
    %462 = vmatmul.f32.gmra.mxu0 %v335
    %v463 = vpop.f32.mrf.mxu0
    %v464 = vadd.f32 %v444, %v463
    %465 = vdwg.mxu0
    %466 = vmatpush.msra.mxu0 %v291
    %467 = vmatpush.msra.mxu0 %v289
    %468 = vmatpush.msra.mxu0 %v287
    %469 = vmatpush.msra.mxu0 %v285
    %470 = vmatpush.msra.mxu0 %v283
    %471 = vmatpush.msra.mxu0 %v281
    %472 = vmatpush.msra.mxu0 %v279
    %473 = vmatpush.msra.mxu0 %v277
    %474 = vmatpush.msra.mxu0 %v275
    %475 = vmatpush.msra.mxu0 %v273
    %476 = vmatpush.msra.mxu0 %v271
    %477 = vmatpush.msra.mxu0 %v269
    %478 = vmatpush.msra.mxu0 %v267
    %479 = vmatpush.msra.mxu0 %v265
    %480 = vmatpush.msra.mxu0 %v263
    %481 = vmatpush.msra.mxu0 %v261
    %482 = vmatmul.f32.gmra.mxu0 %v336
    %v483 = vpop.f32.mrf.mxu0
    %v484 = vadd.f32 %v464, %v483
    %485 = vdwg.mxu0
    %486 = vmatpush.msra.mxu0 %v323
    %487 = vmatpush.msra.mxu0 %v321
    %488 = vmatpush.msra.mxu0 %v319
    %489 = vmatpush.msra.mxu0 %v317
    %490 = vmatpush.msra.mxu0 %v315
    %491 = vmatpush.msra.mxu0 %v313
    %492 = vmatpush.msra.mxu0 %v311
    %493 = vmatpush.msra.mxu0 %v309
    %494 = vmatpush.msra.mxu0 %v307
    %495 = vmatpush.msra.mxu0 %v305
    %496 = vmatpush.msra.mxu0 %v303
    %497 = vmatpush.msra.mxu0 %v301
    %498 = vmatpush.msra.mxu0 %v299
    %499 = vmatpush.msra.mxu0 %v297
    %500 = vmatpush.msra.mxu0 %v295
    %501 = vmatpush.msra.mxu0 %v293
    %502 = vmatmul.f32.gmra.mxu0 %v337
    %v503 = vpop.f32.mrf.mxu0
    %v504 = vadd.f32 %v484, %v503
    %505 = vdwg.mxu0
    %506 = vmatpush.msra.mxu0 %v100
    %507 = vmatpush.msra.mxu0 %v98
    %508 = vmatpush.msra.mxu0 %v96
    %509 = vmatpush.msra.mxu0 %v94
    %510 = vmatpush.msra.mxu0 %v92
    %511 = vmatpush.msra.mxu0 %v90
    %512 = vmatpush.msra.mxu0 %v88
    %513 = vmatpush.msra.mxu0 %v86
    %514 = vmatpush.msra.mxu0 %v84
    %515 = vmatpush.msra.mxu0 %v82
    %516 = vmatpush.msra.mxu0 %v80
    %517 = vmatpush.msra.mxu0 %v78
    %518 = vmatpush.msra.mxu0 %v76
    %519 = vmatpush.msra.mxu0 %v74
    %520 = vmatpush.msra.mxu0 %v72
    %521 = vmatpush.msra.mxu0 %v70
    %522 = vmatmul.f32.gmra.mxu0 %v330
    %v523 = vpop.f32.mrf.mxu0
    %v524 = vadd.f32 0.0, %v523
    %525 = vdwg.mxu0
    %526 = vmatpush.msra.mxu0 %v132
    %527 = vmatpush.msra.mxu0 %v130
    %528 = vmatpush.msra.mxu0 %v128
    %529 = vmatpush.msra.mxu0 %v126
    %530 = vmatpush.msra.mxu0 %v124
    %531 = vmatpush.msra.mxu0 %v122
    %532 = vmatpush.msra.mxu0 %v120
    %533 = vmatpush.msra.mxu0 %v118
    %534 = vmatpush.msra.mxu0 %v116
    %535 = vmatpush.msra.mxu0 %v114
    %536 = vmatpush.msra.mxu0 %v112
    %537 = vmatpush.msra.mxu0 %v110
    %538 = vmatpush.msra.mxu0 %v108
    %539 = vmatpush.msra.mxu0 %v106
    %540 = vmatpush.msra.mxu0 %v104
    %541 = vmatpush.msra.mxu0 %v102
    %542 = vmatmul.f32.gmra.mxu0 %v331
    %v543 = vpop.f32.mrf.mxu0
    %v544 = vadd.f32 %v524, %v543
    %545 = vdwg.mxu0
    %546 = vmatpush.msra.mxu0 %v164
    %547 = vmatpush.msra.mxu0 %v162
    %548 = vmatpush.msra.mxu0 %v160
    %549 = vmatpush.msra.mxu0 %v158
    %550 = vmatpush.msra.mxu0 %v156
    %551 = vmatpush.msra.mxu0 %v154
    %552 = vmatpush.msra.mxu0 %v152
    %553 = vmatpush.msra.mxu0 %v150
    %554 = vmatpush.msra.mxu0 %v148
    %555 = vmatpush.msra.mxu0 %v146
    %556 = vmatpush.msra.mxu0 %v144
    %557 = vmatpush.msra.mxu0 %v142
    %558 = vmatpush.msra.mxu0 %v140
    %559 = vmatpush.msra.mxu0 %v138
    %560 = vmatpush.msra.mxu0 %v136
    %561 = vmatpush.msra.mxu0 %v134
    %562 = vmatmul.f32.gmra.mxu0 %v332
    %v563 = vpop.f32.mrf.mxu0
    %v564 = vadd.f32 %v544, %v563
    %565 = vdwg.mxu0
    %566 = vmatpush.msra.mxu0 %v196
    %567 = vmatpush.msra.mxu0 %v194
    %568 = vmatpush.msra.mxu0 %v192
    %569 = vmatpush.msra.mxu0 %v190
    %570 = vmatpush.msra.mxu0 %v188
    %571 = vmatpush.msra.mxu0 %v186
    %572 = vmatpush.msra.mxu0 %v184
    %573 = vmatpush.msra.mxu0 %v182
    %574 = vmatpush.msra.mxu0 %v180
    %575 = vmatpush.msra.mxu0 %v178
    %576 = vmatpush.msra.mxu0 %v176
    %577 = vmatpush.msra.mxu0 %v174
    %578 = vmatpush.msra.mxu0 %v172
    %579 = vmatpush.msra.mxu0 %v170
    %580 = vmatpush.msra.mxu0 %v168
    %581 = vmatpush.msra.mxu0 %v166
    %582 = vmatmul.f32.gmra.mxu0 %v333
    %v583 = vpop.f32.mrf.mxu0
    %v584 = vadd.f32 %v564, %v583
    %585 = vdwg.mxu0
    %586 = vmatpush.msra.mxu0 %v228
    %587 = vmatpush.msra.mxu0 %v226
    %588 = vmatpush.msra.mxu0 %v224
    %589 = vmatpush.msra.mxu0 %v222
    %590 = vmatpush.msra.mxu0 %v220
    %591 = vmatpush.msra.mxu0 %v218
    %592 = vmatpush.msra.mxu0 %v216
    %593 = vmatpush.msra.mxu0 %v214
    %594 = vmatpush.msra.mxu0 %v212
    %595 = vmatpush.msra.mxu0 %v210
    %596 = vmatpush.msra.mxu0 %v208
    %597 = vmatpush.msra.mxu0 %v206
    %598 = vmatpush.msra.mxu0 %v204
    %599 = vmatpush.msra.mxu0 %v202
    %600 = vmatpush.msra.mxu0 %v200
    %601 = vmatpush.msra.mxu0 %v198
    %602 = vmatmul.f32.gmra.mxu0 %v334
    %v603 = vpop.f32.mrf.mxu0
    %v604 = vadd.f32 %v584, %v603
    %605 = vdwg.mxu0
    %606 = vmatpush.msra.mxu0 %v260
    %607 = vmatpush.msra.mxu0 %v258
    %608 = vmatpush.msra.mxu0 %v256
    %609 = vmatpush.msra.mxu0 %v254
    %610 = vmatpush.msra.mxu0 %v252
    %611 = vmatpush.msra.mxu0 %v250
    %612 = vmatpush.msra.mxu0 %v248
    %613 = vmatpush.msra.mxu0 %v246
    %614 = vmatpush.msra.mxu0 %v244
    %615 = vmatpush.msra.mxu0 %v242
    %616 = vmatpush.msra.mxu0 %v240
    %617 = vmatpush.msra.mxu0 %v238
    %618 = vmatpush.msra.mxu0 %v236
    %619 = vmatpush.msra.mxu0 %v234
    %620 = vmatpush.msra.mxu0 %v232
    %621 = vmatpush.msra.mxu0 %v230
    %622 = vmatmul.f32.gmra.mxu0 %v335
    %v623 = vpop.f32.mrf.mxu0
    %v624 = vadd.f32 %v604, %v623
    %625 = vdwg.mxu0
    %626 = vmatpush.msra.mxu0 %v292
    %627 = vmatpush.msra.mxu0 %v290
    %628 = vmatpush.msra.mxu0 %v288
    %629 = vmatpush.msra.mxu0 %v286
    %630 = vmatpush.msra.mxu0 %v284
    %631 = vmatpush.msra.mxu0 %v282
    %632 = vmatpush.msra.mxu0 %v280
    %633 = vmatpush.msra.mxu0 %v278
    %634 = vmatpush.msra.mxu0 %v276
    %635 = vmatpush.msra.mxu0 %v274
    %636 = vmatpush.msra.mxu0 %v272
    %637 = vmatpush.msra.mxu0 %v270
    %638 = vmatpush.msra.mxu0 %v268
    %639 = vmatpush.msra.mxu0 %v266
    %640 = vmatpush.msra.mxu0 %v264
    %641 = vmatpush.msra.mxu0 %v262
    %642 = vmatmul.f32.gmra.mxu0 %v336
    %v643 = vpop.f32.mrf.mxu0
    %v644 = vadd.f32 %v624, %v643
    %645 = vdwg.mxu0
    %646 = vmatpush.msra.mxu0 %v324
    %647 = vmatpush.msra.mxu0 %v322
    %648 = vmatpush.msra.mxu0 %v320
    %649 = vmatpush.msra.mxu0 %v318
    %650 = vmatpush.msra.mxu0 %v316
    %651 = vmatpush.msra.mxu0 %v314
    %652 = vmatpush.msra.mxu0 %v312
    %653 = vmatpush.msra.mxu0 %v310
    %654 = vmatpush.msra.mxu0 %v308
    %655 = vmatpush.msra.mxu0 %v306
    %656 = vmatpush.msra.mxu0 %v304
    %657 = vmatpush.msra.mxu0 %v302
    %658 = vmatpush.msra.mxu0 %v300
    %659 = vmatpush.msra.mxu0 %v298
    %660 = vmatpush.msra.mxu0 %v296
    %661 = vmatpush.msra.mxu0 %v294
    %662 = vmatmul.f32.gmra.mxu0 %v337
    %v663 = vpop.f32.mrf.mxu0
    %v664 = vadd.f32 %v644, %v663
    %665 = vdwg.mxu0
    %v668 = vrot.slane %v664, 6
    %vm669 = vcmask 1041408
    %v670 = vsel %vm669, %v504, %v668
    %v672 = vadd.f32 %v68, %v670
    %673 = vst [vmem:[#allocation2] sm:$0xf] %v672
    // Predicated region
    $region34: #{tpu_custom_call.1} parent=1 // pred_check
      %p674 = pneg %p61
    $region35: #{tpu_custom_call.1} parent=1 // pred_check_branch
      %676 = sbr.rel (%p674) target = $region37
    $region36: #{tpu_custom_call.1} parent=1 // pred_region
      %v677 = vld [vmem:[#allocation2] sm:$0xf]
      %v678 = vld [vmem:[#allocation8] sm:$0x3]
      %v680 = vperm.slane %v678, 0
      %v681 = vperm.slane %v678, 1
      %v682 = vrot.slane %v681, 6
      %v683 = vsel %vm669, %v680, %v682
      %v685 = vadd.f32 %v677, %v683
      %v686 = vlaneseq
      %v687 = vand.u32 %v686, 127
      %v688 = vsel %vm669, %v685, -inf
      %689 = vmax.xlane.f32.xlu0 %v688
      %v690 = vpop.xlane.xlu0 %689
      %vm691 = vcmp.eq.f32.partialorder %v685, %v690
      %v692 = vsel %vm691, %v687, 128
      %v693 = vsel %vm669, %v692, 2147483647
      %v694 = vand.u32 %v693, 65535
      %v695 = vshra.s32 %v693, 16
      %v696 = vcvt.s32.f32 %v694
      %v697 = vcvt.s32.f32 %v695
      %698 = vmin.xlane.f32.xlu0 %v697
      %v699 = vpop.xlane.xlu0 %698
      %vm700 = vcmp.eq.f32.partialorder %v697, %v699
      %v701 = vsel %vm700, %v696, inf
      %702 = vmin.xlane.f32.xlu0 %v701
      %v703 = vpop.xlane.xlu0 %702
      %v704 = vcvt.f32.s32 %v703
      %v705 = vcvt.f32.s32 %v699
      %v706 = vshll.u32 %v705, 16
      %v707 = vadd.s32 %v706, %v704
      %vm708 = vcmp.eq.s32.totalorder %v687, %v707
      %v709 = vsel %vm708, 1, 0
      %v710 = vcvt.s32.f32 %v709
      %v711 = vld [vmem:[%s3] sm:$0x1]
      %v713 = vrot.slane %v685, 2
      %v715 = vmul.f32 %v713, 22.5
      %v717 = vperm.slane %v711, 0
      %v719 = vadd.f32 %v717, %v715
      %v720 = vmul.f32 %v710, %v719
      %v721 = vsel %vm669, %v720, 0.0
      %722 = vadd.xlane.f32.xlu0 %v721
      %v723 = vpop.xlane.xlu0 %722
      %v725 = vperm.slane %v723, %v687
      %vm727 = vcmask 8192
      %728 = vst.msk [vmem:[#allocation9] sm:$0x1] %vm727, %v725
    $region37: #{tpu_custom_call.1} parent=1 // pred_fallthru
      _
    // Predicated region
    $region38: #{tpu_custom_call.1} parent=1 // pred_check
      _
    $region39: #{tpu_custom_call.1} parent=1 // pred_check_branch
      %730 = sbr.rel (0) target = $region41
    $region40: #{tpu_custom_call.1} parent=1 // pred_region
      %732 = vsyncadd [#allocation5], 0
      %s734 = sshll.u32 [#allocation9], 4
      %s735 = int_to_ptr.vmem [resolvable:$true] %s734
      %s736 = sshll.u32 %s4, 4
      %s737 = int_to_ptr.hbm [resolvable:$true] %s736
      %739 = dma.vmem_to_hbm [thread:$0]  %s735, 16, %s737, [#allocation5]
    $region41: #{tpu_custom_call.1} parent=1 // pred_fallthru
      _
    // Predicated region
    $region42: #{tpu_custom_call.1} parent=1 // pred_check
      _
    $region43: #{tpu_custom_call.1} parent=1 // pred_check_branch
      %741 = sbr.rel (0) target = $region45
    $region44: #{tpu_custom_call.1} parent=1 // pred_region
      %743 = dma.done [#allocation5], 16
    $region45: #{tpu_custom_call.1} parent=1 // pred_fallthru
      _
    %744 = vsyncpa [#allocation4], 1
    %745 = vsyncpa [#allocation7], 1
    %746 = vsyncpa [#allocation5], 1

</llo_original>
